<compile_context>
chip_gen: v5e
topology: v5e:2x2
jax: 0.10.0
libtpu: 0.0.40
codegen_flags: <defaults>
</compile_context>

<pallas_src>
import jax
import jax.numpy as jnp
from jax.experimental import pallas as pl
from jax.experimental.pallas import tpu as pltpu


def _round_up(x, m):
    return (x + m - 1) // m * m


def _vmem_cap_bytes():
    """~3/4 of physical VMEM (96 MiB on 128-MiB v5e/v6e, 48 MiB on 64-MiB v7x)."""
    try:
        cap = int(pltpu.get_tpu_info().vmem_capacity_bytes)
        if cap > 0:
            return cap * 3 // 4
    except Exception:
        pass
    return 48 << 20  # safe on all generations


def _pick_tb(B_p, fits):
    """Largest batch tile (multiple of 16, <= 512) dividing B_p that fits the
    VMEM budget, preferring an even tile count so v7x's two TensorCores split
    the parallel batch axis evenly."""
    cands = [t for t in range(16, min(B_p, 512) + 1, 16)
             if B_p % t == 0 and fits(t)]
    if not cands:
        return 16
    cands.sort(reverse=True)
    for t in cands:
        if (B_p // t) % 2 == 0:
            return t
    return cands[0]


# --------------------------------------------------------------------------
# Fast path: one full bf16 layer weight per grid step, grid = (bi, l).
# --------------------------------------------------------------------------
def _mlp_fused_kernel(x_ref, w_ref, b_ref, o_ref, act_ref):
    l = pl.program_id(1)
    n_layers = pl.num_programs(1)
    cur = jax.lax.rem(l, 2)

    # Stage the (bf16) input block into ping-pong slot 0, once per batch tile.
    @pl.when(l == 0)
    def _():
        act_ref[0] = x_ref[...]

    a = act_ref[cur]                                           # (tb, dim_p) bf16
    y = jnp.dot(a, w_ref[...], preferred_element_type=jnp.float32)
    y = jnp.maximum(y + b_ref[...], 0.0)                       # f32 epilogue (VPU)

    @pl.when(l < n_layers - 1)
    def _():
        act_ref[1 - cur] = y.astype(jnp.bfloat16)              # next layer's input

    @pl.when(l == n_layers - 1)
    def _():
        o_ref[...] = y.astype(o_ref.dtype)                     # one writeback per bi


# --------------------------------------------------------------------------
# Streaming path (large dim): (tk, tn) weight tiles with f32 K accumulator.
# grid = (bi, l, nj, kk), K innermost.
# --------------------------------------------------------------------------
def _mlp_stream_kernel(x_ref, w_ref, b_ref, o_ref, act_ref, acc_ref):
    l = pl.program_id(1)
    nj = pl.program_id(2)
    kk = pl.program_id(3)
    n_layers = pl.num_programs(1)
    n_k = pl.num_programs(3)
    _, nk_static, _, tk = act_ref.shape
    tn = acc_ref.shape[1]
    cur = jax.lax.rem(l, 2)

    # Layer-0 prologue: stage the resident bf16 x block, K-chunked, into slot 0
    # (once per batch tile).
    @pl.when(jnp.logical_and(l == 0, jnp.logical_and(nj == 0, kk == 0)))
    def _():
        for c in range(nk_static):
            act_ref[0, c] = x_ref[:, c * tk:(c + 1) * tk]

    # K accumulation in f32; operands are bf16 on the MXU.
    @pl.when(kk == 0)
    def _():
        acc_ref[...] = jnp.zeros_like(acc_ref)

    acc_ref[...] += jnp.dot(act_ref[cur, kk], w_ref[...],
                            preferred_element_type=jnp.float32)

    # Epilogue: bias + ReLU in f32 on the VPU.
    @pl.when(kk == n_k - 1)
    def _():
        y = jnp.maximum(acc_ref[...] + b_ref[...], 0.0)        # (tb, tn) f32

        @pl.when(l < n_layers - 1)
        def _():
            act_ref[1 - cur, nj] = y.astype(jnp.bfloat16)

        @pl.when(l == n_layers - 1)
        def _():
            start = pl.multiple_of(nj * tn, tn)
            o_ref[:, pl.ds(start, tn)] = y.astype(o_ref.dtype)


def dummy_model_forward(x, w_stack, b_stack):
    """x: [B, dim] f32; w_stack: [L, dim, dim] bf16 (pre-transposed (in, out));
    b_stack: [L, 1, dim] f32.  Returns [B, dim] f32."""
    B, dim = x.shape
    L = w_stack.shape[0]

    # Pad to MXU/VPU-friendly shapes (lane dim multiple of 128, batch multiple
    # of 16 for bf16 sublane packing).  Zero padding is exact for Linear+ReLU:
    # padded weight rows/cols and bias entries are zero, so padded activations
    # stay zero.
    dim_p = _round_up(dim, 128)
    B_p = _round_up(B, 16)
    x_p = jnp.pad(x, ((0, B_p - B), (0, dim_p - dim))).astype(jnp.bfloat16)
    w_p = jnp.pad(w_stack, ((0, 0), (0, dim_p - dim), (0, dim_p - dim)))
    b_p = jnp.pad(b_stack, ((0, 0), (0, 0), (0, dim_p - dim)))

    cap = _vmem_cap_bytes()
    headroom = 2 << 20

    # ---------------- Fast path: whole layer weight resident per grid step.
    def fast_need(tb):
        return (2 * tb * dim_p * 2        # x block, double-buffered (bf16)
                + 2 * dim_p * dim_p * 2   # weight block, double-buffered (bf16)
                + 2 * dim_p * 4           # bias block, double-buffered (f32)
                + 2 * tb * dim_p * 4      # output block, double-buffered (f32)
                + 2 * tb * dim_p * 2)     # ping-pong activation scratch (bf16)

    use_fast = dim_p <= 1024 and fast_need(16) + headroom <= cap
    if use_fast:
        tb = _pick_tb(B_p, lambda t: fast_need(t) + headroom <= cap)
        need = fast_need(tb)
        vmem_limit = int(min(cap, 2 * need + (4 << 20)))
        out_p = pl.pallas_call(
            _mlp_fused_kernel,
            out_shape=jax.ShapeDtypeStruct((B_p, dim_p), jnp.float32),
            grid_spec=pltpu.PrefetchScalarGridSpec(
                num_scalar_prefetch=0,
                grid=(B_p // tb, L),
                in_specs=[
                    # x: resident per batch tile (re-fetched only when bi changes).
                    pl.BlockSpec((tb, dim_p), lambda bi, l: (bi, 0)),
                    # W_l: one full bf16 layer weight per layer step.
                    pl.BlockSpec((None, dim_p, dim_p), lambda bi, l: (l, 0, 0)),
                    # b_l: (1, dim_p) f32.
                    pl.BlockSpec((None, 1, dim_p), lambda bi, l: (l, 0, 0)),
                ],
                # Output resident per batch tile; written back once per bi.
                out_specs=pl.BlockSpec((tb, dim_p), lambda bi, l: (bi, 0)),
                scratch_shapes=[
                    pltpu.VMEM((2, tb, dim_p), jnp.bfloat16),  # ping-pong activations
                ],
            ),
            compiler_params=pltpu.CompilerParams(
                dimension_semantics=("parallel", "arbitrary"),
                vmem_limit_bytes=vmem_limit,
            ),
        )(x_p, w_p, b_p)
        return out_p[:B, :dim]

    # ---------------- Streaming path: tiled weights, f32 K accumulator.
    tn = tk = 256 if dim_p % 256 == 0 else 128
    nN, nK = dim_p // tn, dim_p // tk

    def stream_need(tb):
        return (2 * tb * dim_p * 2        # x block (bf16, double-buffered)
                + 3 * tk * tn * 2         # weight tile (bf16, 3-deep buffered)
                + 2 * tn * 4              # bias tile (f32, double-buffered)
                + 2 * tb * dim_p * 4      # output block (f32, double-buffered)
                + 2 * tb * dim_p * 2      # ping-pong activation scratch (bf16)
                + tb * tn * 4)            # K accumulator (f32)

    tb = _pick_tb(B_p, lambda t: stream_need(t) + headroom <= cap)
    need = stream_need(tb)
    vmem_limit = int(min(cap, 2 * need + (4 << 20)))

    out_p = pl.pallas_call(
        _mlp_stream_kernel,
        out_shape=jax.ShapeDtypeStruct((B_p, dim_p), jnp.float32),
        grid_spec=pltpu.PrefetchScalarGridSpec(
            num_scalar_prefetch=0,
            grid=(B_p // tb, L, nN, nK),
            in_specs=[
                pl.BlockSpec((tb, dim_p), lambda bi, l, nj, kk: (bi, 0)),
                # W_l: streamed (tk, tn) bf16 tiles, K innermost, 3-deep prefetch.
                pl.BlockSpec((None, tk, tn), lambda bi, l, nj, kk: (l, kk, nj),
                             pipeline_mode=pl.Buffered(3)),
                pl.BlockSpec((None, 1, tn), lambda bi, l, nj, kk: (l, 0, nj)),
            ],
            # Output resident per batch tile; written back once per bi.
            out_specs=pl.BlockSpec((tb, dim_p), lambda bi, l, nj, kk: (bi, 0)),
            scratch_shapes=[
                pltpu.VMEM((2, nK, tb, tk), jnp.bfloat16),   # ping-pong activations
                pltpu.VMEM((tb, tn), jnp.float32),           # K accumulator
            ],
        ),
        compiler_params=pltpu.CompilerParams(
            dimension_semantics=("parallel", "arbitrary", "arbitrary", "arbitrary"),
            vmem_limit_bytes=vmem_limit,
        ),
    )(x_p, w_p, b_p)
    return out_p[:B, :dim]


def init_params(key, layers, dim):
    """PyTorch nn.Linear-style init U(-1/sqrt(dim), 1/sqrt(dim)).
    Weights are stored pre-transposed (in, out) and cast to bfloat16 (the
    kernel accumulates in f32); biases stay f32."""
    bound = 1.0 / float(dim) ** 0.5
    ws, bs = [], []
    for _ in range(layers):
        key, kw, kb = jax.random.split(key, 3)
        W = jax.random.uniform(kw, (dim, dim), jnp.float32, -bound, bound)  # (out, in)
        b = jax.random.uniform(kb, (dim,), jnp.float32, -bound, bound)
        ws.append(W.T.astype(jnp.bfloat16))   # store (in, out), bf16
        bs.append(b.reshape(1, dim))
    return jnp.stack(ws), jnp.stack(bs)


def reference_forward(x, w_stack, b_stack):
    """Pure-JAX reference with identical numerics (bf16 operands, f32 accum)."""
    act = x
    for l in range(w_stack.shape[0]):
        y = jnp.dot(act.astype(jnp.bfloat16), w_stack[l],
                    preferred_element_type=jnp.float32) + b_stack[l]
        act = jnp.maximum(y, 0.0)
    return act


if __name__ == "__main__":
    # MXU-friendly demo shapes: dim is a multiple of 128 (lane-dense tiles) and
    # batch gives two batch tiles so the "parallel" axis can use both v7x TCs.
    layers, dim, batch = 3, 256, 256

    key = jax.random.PRNGKey(0)
    kx, kp = jax.random.split(key)
    x = jax.random.normal(kx, (batch, dim), jnp.float32)
    w_stack, b_stack = init_params(kp, layers, dim)

    out = dummy_model_forward(x, w_stack, b_stack)
    out = jax.block_until_ready(out)

    ref = reference_forward(x, w_stack, b_stack)
    assert out.shape == (batch, dim)
    assert jnp.allclose(out, ref, atol=1e-2, rtol=1e-2), "mismatch vs reference"

    print("KERNEL_OK")
</pallas_src>

<mosaic_0001>
module attributes {stable_mosaic.version = 11 : i64} {
  func.func @_mlp_fused_kernel(%arg0: i32, %arg1: i32, %arg2: memref<128x256xbf16, #tpu.memory_space<vmem>>, %arg3: memref<1x256x256xbf16, #tpu.memory_space<vmem>>, %arg4: memref<1x1x256xf32, #tpu.memory_space<vmem>>, %arg5: memref<128x256xf32, #tpu.memory_space<vmem>>, %arg6: memref<2x128x256xbf16, #tpu.memory_space<vmem>>) attributes {dimension_semantics = [#tpu.dimension_semantics<parallel>, #tpu.dimension_semantics<arbitrary>], iteration_bounds = array<i64: 2, 3>, scalar_prefetch = 0 : i64, scratch_operands = 1 : i64, tpu.core_type = #tpu.core_type<tc>, window_params = [{transform_indices = @transform_0, window_bounds = array<i64: 128, 256>}, {transform_indices = @transform_1, window_bounds = array<i64: 1, 256, 256>}, {transform_indices = @transform_2, window_bounds = array<i64: 1, 1, 256>}, {transform_indices = @transform_3, window_bounds = array<i64: 128, 256>}]} {
    %c2_i32 = arith.constant 2 : i32
    %0 = arith.remsi %arg1, %c2_i32 : i32
    %c0_i32 = arith.constant 0 : i32
    %1 = arith.cmpi eq, %arg1, %c0_i32 : i32
    %2 = arith.extui %1 : i1 to i32
    %c0_i32_0 = arith.constant 0 : i32
    %3 = arith.cmpi ne, %2, %c0_i32_0 : i32
    scf.if %3 {
      %c0_13 = arith.constant 0 : index
      %c0_14 = arith.constant 0 : index
      %22 = vector.load %arg2[%c0_13, %c0_14] : memref<128x256xbf16, #tpu.memory_space<vmem>>, vector<128x256xbf16>
      %c0_15 = arith.constant 0 : index
      %c0_16 = arith.constant 0 : index
      %c0_17 = arith.constant 0 : index
      %23 = vector.load %arg6[%c0_15, %c0_16, %c0_17] : memref<2x128x256xbf16, #tpu.memory_space<vmem>>, vector<1x128x256xbf16>
      %24 = vector.shape_cast %23 : vector<1x128x256xbf16> to vector<128x256xbf16>
      %25 = vector.shape_cast %22 : vector<128x256xbf16> to vector<1x128x256xbf16>
      tpu.vector_store %arg6[%c0_15, %c0_16, %c0_17], %25 {strides = array<i32>} : memref<2x128x256xbf16, #tpu.memory_space<vmem>>, vector<1x128x256xbf16>,
    } else {
    }
    %4 = arith.index_cast %0 : i32 to index
    %c0 = arith.constant 0 : index
    %c0_1 = arith.constant 0 : index
    %5 = vector.load %arg6[%4, %c0, %c0_1] : memref<2x128x256xbf16, #tpu.memory_space<vmem>>, vector<1x128x256xbf16>
    %6 = vector.shape_cast %5 : vector<1x128x256xbf16> to vector<128x256xbf16>
    %c0_2 = arith.constant 0 : index
    %c0_3 = arith.constant 0 : index
    %c0_4 = arith.constant 0 : index
    %7 = vector.load %arg3[%c0_2, %c0_3, %c0_4] : memref<1x256x256xbf16, #tpu.memory_space<vmem>>, vector<1x256x256xbf16>
    %8 = vector.shape_cast %7 : vector<1x256x256xbf16> to vector<256x256xbf16>
    %cst = arith.constant dense<0.000000e+00> : vector<128x256xf32>
    %9 = tpu.matmul %6, %8, %cst {dimension_numbers = #tpu.dot_dimension_numbers<[1], [0], [0], [1], [0, 0, 1, 1], [], []>} : vector<128x256xbf16>, vector<256x256xbf16>, vector<128x256xf32> -> vector<128x256xf32>
    %c0_5 = arith.constant 0 : index
    %c0_6 = arith.constant 0 : index
    %c0_7 = arith.constant 0 : index
    %10 = vector.load %arg4[%c0_5, %c0_6, %c0_7] : memref<1x1x256xf32, #tpu.memory_space<vmem>>, vector<1x1x256xf32>
    %11 = vector.shape_cast %10 : vector<1x1x256xf32> to vector<1x256xf32>
    %12 = vector.broadcast %11 : vector<1x256xf32> to vector<128x256xf32>
    %13 = arith.addf %9, %12 : vector<128x256xf32>
    %cst_8 = arith.constant 0.000000e+00 : f32
    %14 = vector.broadcast %cst_8 : f32 to vector<128x256xf32>
    %15 = arith.maximumf %13, %14 : vector<128x256xf32>
    %c2_i32_9 = arith.constant 2 : i32
    %16 = arith.cmpi slt, %arg1, %c2_i32_9 : i32
    %17 = arith.extui %16 : i1 to i32
    %c0_i32_10 = arith.constant 0 : i32
    %18 = arith.cmpi ne, %17, %c0_i32_10 : i32
    scf.if %18 {
      %22 = arith.truncf %15 : vector<128x256xf32> to vector<128x256xbf16>
      %c1_i32 = arith.constant 1 : i32
      %23 = arith.subi %c1_i32, %0 : i32
      %24 = arith.index_cast %23 : i32 to index
      %c0_13 = arith.constant 0 : index
      %c0_14 = arith.constant 0 : index
      %25 = vector.load %arg6[%24, %c0_13, %c0_14] : memref<2x128x256xbf16, #tpu.memory_space<vmem>>, vector<1x128x256xbf16>
      %26 = vector.shape_cast %25 : vector<1x128x256xbf16> to vector<128x256xbf16>
      %27 = vector.shape_cast %22 : vector<128x256xbf16> to vector<1x128x256xbf16>
      tpu.vector_store %arg6[%24, %c0_13, %c0_14], %27 {strides = array<i32>} : memref<2x128x256xbf16, #tpu.memory_space<vmem>>, vector<1x128x256xbf16>,
    } else {
    }
    %c2_i32_11 = arith.constant 2 : i32
    %19 = arith.cmpi eq, %arg1, %c2_i32_11 : i32
    %20 = arith.extui %19 : i1 to i32
    %c0_i32_12 = arith.constant 0 : i32
    %21 = arith.cmpi ne, %20, %c0_i32_12 : i32
    scf.if %21 {
      %c0_13 = arith.constant 0 : index
      %c0_14 = arith.constant 0 : index
      %22 = vector.load %arg5[%c0_13, %c0_14] : memref<128x256xf32, #tpu.memory_space<vmem>>, vector<128x256xf32>
      tpu.vector_store %arg5[%c0_13, %c0_14], %15 {strides = array<i32>} : memref<128x256xf32, #tpu.memory_space<vmem>>, vector<128x256xf32>,
    } else {
    }
    return
  }
  func.func @transform_0(%arg0: i32, %arg1: i32) -> (i32, i32) {
    %c0_i32 = arith.constant 0 : i32
    %c0_i32_0 = arith.constant 0 : i32
    return %arg0, %c0_i32 : i32, i32
  }
  func.func @transform_1(%arg0: i32, %arg1: i32) -> (i32, i32, i32) {
    %c0_i32 = arith.constant 0 : i32
    %c0_i32_0 = arith.constant 0 : i32
    %c0_i32_1 = arith.constant 0 : i32
    return %arg1, %c0_i32, %c0_i32_0 : i32, i32, i32
  }
  func.func @transform_2(%arg0: i32, %arg1: i32) -> (i32, i32, i32) {
    %c0_i32 = arith.constant 0 : i32
    %c0_i32_0 = arith.constant 0 : i32
    %c0_i32_1 = arith.constant 0 : i32
    return %arg1, %c0_i32, %c0_i32_0 : i32, i32, i32
  }
  func.func @transform_3(%arg0: i32, %arg1: i32) -> (i32, i32) {
    %c0_i32 = arith.constant 0 : i32
    %c0_i32_0 = arith.constant 0 : i32
    return %arg0, %c0_i32 : i32, i32
  }
}

</mosaic_0001>

<llo_original>
// kernel: tpu_custom_call.1
$region0: #{tpu_custom_call.1}
  #allocation0 [shape = 'u32[]', space=smem, size = 0x4, offset = 0x4, fixed_abs, tag = 'smem constant byte address 0x4 - core index']
  #allocation1 [shape = 'u32[72,128]{1,0:T(1,128)}', space=vmem, size = 0x9000, scoped, tag = 'internal scratch']
  #allocation2 [shape = 'bf16[2,128,256]{2,1,0:T(8,128)(2,1)}', space=vmem, size = 0x20000, scoped, tag = 'scratch operand']
  %s0 = inlined_call_operand.hbm [shape: bf16[256,256], index: 0, kind: input, shape index: {}]
  %s1 = inlined_call_operand.hbm [shape: bf16[3,256,256], index: 1, kind: input, shape index: {}]
  %s2 = inlined_call_operand.hbm [shape: f32[3,1,256], index: 2, kind: input, shape index: {}]
  %s3 = inlined_call_operand.hbm [shape: f32[256,256], index: 3, kind: output, shape index: {}]
  %s4 = sld [smem:[#allocation0]]
  $region69: #{tpu_custom_call.1} parent=0
    _
  %s6 = ssub.s32 1, %s4
  %s7 = scalar_select 0, %s6, %s4
  $region1: #{tpu_custom_call.1} parent=0
    #allocation3 [shape = 'u8[131072]{0}', space=vmem, size = 0x20000, scoped, tag = 'input window, operand 0']
    #allocation4 [shape = 's32[2]{0}', space=sflag, size = 0x8, scoped, tag = 'scoped memory for tpu_custom_call.1']
    #allocation5 [shape = 's32[2]{0}', space=sflag, size = 0x8, scoped, tag = 'scoped memory for tpu_custom_call.1']
    #allocation6 [shape = 'u8[262144]{0}', space=vmem, size = 0x40000, scoped, tag = 'input window, operand 1']
    #allocation7 [shape = 's32[2]{0}', space=sflag, size = 0x8, scoped, tag = 'scoped memory for tpu_custom_call.1']
    #allocation8 [shape = 'u8[2048]{0}', space=vmem, size = 0x800, scoped, tag = 'input window, operand 2']
    #allocation9 [shape = 'u8[262144]{0}', space=vmem, size = 0x40000, scoped, tag = 'output window, operand 0']
    %8 = vsyncpa [#allocation4], 0
    %s9 = scalar_lea.sflag [#allocation4], 1
    %10 = vsyncpa %s9, 0
    %11 = vsyncpa [#allocation7], 0
    %s12 = scalar_lea.sflag [#allocation7], 1
    %13 = vsyncpa %s12, 0
    %14 = vsyncpa [#allocation5], 0
    %s15 = scalar_lea.sflag [#allocation5], 1
    %16 = vsyncpa %s15, 0
    loop: start=0, step=1, limit=8
    $region2: #{tpu_custom_call.1} parent=1 // loop_pre_header
      _
    $region3: #{tpu_custom_call.1} parent=1 // loop_header
      %s18 = sphi 0, %s22
      %p19 = scmp.ge.s32.totalorder %s18, 8
      %s25 = sphi 0, %s37
      %s26 = sphi 0, %s33
      %s27 = sphi 0, %s25
      %s28 = sphi 0, %s26
      %s29 = sphi 0, %s27
      %s30 = sphi 0, %s28
      %s40 = sphi 0, %s42
      %s43 = sphi 0, %s40
      %s44 = sphi 0, %s43
      %s60 = sphi 0, %s44
      %s66 = sphi 0, %s68
      %s69 = sphi 0, %s66
      %s70 = sphi 0, %s69
      %s86 = sphi 0, %s70
      %s92 = sphi 0, %s94
      %s95 = sphi 0, %s92
      %s96 = sphi 0, %s95
      %s112 = sphi 0, %s96
      %s118 = sphi 0, %s120
      %s121 = sphi 0, %s118
      %s122 = sphi 0, %s121
      %s138 = sphi 0, %s122
    $region4: #{tpu_custom_call.1} parent=1 // loop_header_branch
      %21 = sbr.rel (%p19) target = $region8
    $region5: #{tpu_custom_call.1} parent=1 // loop_body
      %s23 = ssub.s32 %s18, 1
      %s24 = ssub.s32 %s18, 2
      %s31 = sadd.s32 1, %s26
      %p32 = scmp.ge.s32.totalorder %s31, 3
      %s33 = scalar_select %p32, 0, %s31
      %s34 = sadd.s32 1, %s25
      %s35 = scalar_select %p32, %s34, %s25
      %p36 = scmp.ge.s32.totalorder %s35, 2
      %s37 = scalar_select %p36, 0, %s35
      %s38 = ssub.s32 %s25, %s37
      %p39 = scmp.eq.s32.totalorder %s38, 0
      %s41 = sadd.s32 %s40, 1
      %s42 = scalar_select %p39, %s40, %s41
      %p45 = pneg %p39
      %p46 = scmp.eq.s32.totalorder %s18, 5
      %p47 = por %p45, %p46
      %p48 = scmp.ne.s32.totalorder %s40, %s43
      %p49 = scmp.eq.s32.totalorder %s18, 0
      %p50 = por %p48, %p49
      %p51 = scmp.ne.s32.totalorder %s40, %s43
      %p52 = scmp.eq.s32.totalorder %s23, 5
      %p53 = por %p51, %p52
      %p54 = scmp.ne.s32.totalorder %s43, %s44
      %p55 = scmp.eq.s32.totalorder %s23, 0
      %p56 = por %p54, %p55
      %p57 = scmp.ne.s32.totalorder %s43, %s44
      %p58 = scmp.eq.s32.totalorder %s24, 5
      %p59 = por %p57, %p58
      %p61 = scmp.ne.s32.totalorder %s44, %s60
      %p62 = scmp.eq.s32.totalorder %s24, 0
      %p63 = por %p61, %p62
      %s64 = ssub.s32 %s26, %s33
      %p65 = scmp.eq.s32.totalorder %s64, 0
      %s67 = sadd.s32 %s66, 1
      %s68 = scalar_select %p65, %s66, %s67
      %p71 = pneg %p65
      %p72 = scmp.eq.s32.totalorder %s18, 5
      %p73 = por %p71, %p72
      %p74 = scmp.ne.s32.totalorder %s66, %s69
      %p75 = scmp.eq.s32.totalorder %s18, 0
      %p76 = por %p74, %p75
      %p77 = scmp.ne.s32.totalorder %s66, %s69
      %p78 = scmp.eq.s32.totalorder %s23, 5
      %p79 = por %p77, %p78
      %p80 = scmp.ne.s32.totalorder %s69, %s70
      %p81 = scmp.eq.s32.totalorder %s23, 0
      %p82 = por %p80, %p81
      %p83 = scmp.ne.s32.totalorder %s69, %s70
      %p84 = scmp.eq.s32.totalorder %s24, 5
      %p85 = por %p83, %p84
      %p87 = scmp.ne.s32.totalorder %s70, %s86
      %p88 = scmp.eq.s32.totalorder %s24, 0
      %p89 = por %p87, %p88
      %s90 = ssub.s32 %s26, %s33
      %p91 = scmp.eq.s32.totalorder %s90, 0
      %s93 = sadd.s32 %s92, 1
      %s94 = scalar_select %p91, %s92, %s93
      %p97 = pneg %p91
      %p98 = scmp.eq.s32.totalorder %s18, 5
      %p99 = por %p97, %p98
      %p100 = scmp.ne.s32.totalorder %s92, %s95
      %p101 = scmp.eq.s32.totalorder %s18, 0
      %p102 = por %p100, %p101
      %p103 = scmp.ne.s32.totalorder %s92, %s95
      %p104 = scmp.eq.s32.totalorder %s23, 5
      %p105 = por %p103, %p104
      %p106 = scmp.ne.s32.totalorder %s95, %s96
      %p107 = scmp.eq.s32.totalorder %s23, 0
      %p108 = por %p106, %p107
      %p109 = scmp.ne.s32.totalorder %s95, %s96
      %p110 = scmp.eq.s32.totalorder %s24, 5
      %p111 = por %p109, %p110
      %p113 = scmp.ne.s32.totalorder %s96, %s112
      %p114 = scmp.eq.s32.totalorder %s24, 0
      %p115 = por %p113, %p114
      %s116 = ssub.s32 %s25, %s37
      %p117 = scmp.eq.s32.totalorder %s116, 0
      %s119 = sadd.s32 %s118, 1
      %s120 = scalar_select %p117, %s118, %s119
      %p123 = pneg %p117
      %p124 = scmp.eq.s32.totalorder %s18, 5
      %p125 = por %p123, %p124
      %p126 = scmp.ne.s32.totalorder %s118, %s121
      %p127 = scmp.eq.s32.totalorder %s18, 0
      %p128 = por %p126, %p127
      %p129 = scmp.ne.s32.totalorder %s118, %s121
      %p130 = scmp.eq.s32.totalorder %s23, 5
      %p131 = por %p129, %p130
      %p132 = scmp.ne.s32.totalorder %s121, %s122
      %p133 = scmp.eq.s32.totalorder %s23, 0
      %p134 = por %p132, %p133
      %p135 = scmp.ne.s32.totalorder %s121, %s122
      %p136 = scmp.eq.s32.totalorder %s24, 5
      %p137 = por %p135, %p136
      %p139 = scmp.ne.s32.totalorder %s122, %s138
      %p140 = scmp.eq.s32.totalorder %s24, 0
      %p141 = por %p139, %p140
      %p142 = scmp.le.s32.totalorder 1, %s18
      %p143 = scmp.lt.s32.totalorder %s18, 7
      %p144 = pnand %p142, %p143
      %p145 = pneg %p144
      // Predicated region
      $region9: #{tpu_custom_call.1} parent=5 // pred_check
        _
      $region10: #{tpu_custom_call.1} parent=5 // pred_check_branch
        %147 = sbr.rel (%p144) target = $region12
      $region11: #{tpu_custom_call.1} parent=5 // pred_region
        %s148 = ssub.s32 %s18, 1
      $region12: #{tpu_custom_call.1} parent=5 // pred_fallthru
        _
      %p149 = scmp.lt.s32.totalorder %s18, 6
      // Predicated region
      $region13: #{tpu_custom_call.1} parent=5 // pred_check
        %p150 = pneg %p149
      $region14: #{tpu_custom_call.1} parent=5 // pred_check_branch
        %152 = sbr.rel (%p150) target = $region16
      $region15: #{tpu_custom_call.1} parent=5 // pred_region
        // Predicated region
        $region17: #{tpu_custom_call.1} parent=15 // pred_check
          %p153 = pneg %p50
        $region18: #{tpu_custom_call.1} parent=15 // pred_check_branch
          %155 = sbr.rel (%p153) target = $region20
        $region19: #{tpu_custom_call.1} parent=15 // pred_region
          %s156 = sand.u32 %s40, 1
          %s157 = scalar_lea.sflag [#allocation4], %s156
          %s158 = sand.u32 %s40, 1
          %s159 = smul.addr %s158, 128
          %s160 = scalar_lea.vmem [#allocation3], %s159
          %s161 = smul.u32 16, %s25
          %163 = vsyncadd %s157, 0
          %s164 = smul.addr %s161, 2
          %s165 = smul.addr %s164, 4
          %s166 = scalar_lea.hbm %s0, %s165
          %s167 = sshll.u32 %s166, 4
          %s168 = int_to_ptr.hbm [resolvable:$true] %s167
          %s169 = sshll.u32 %s160, 4
          %s170 = int_to_ptr.vmem [resolvable:$true] %s169
          %175 = dma.hbm_to_vmem [thread:$0]  %s168, 2048, %s170, %s157, 128, 128, 8
        $region20: #{tpu_custom_call.1} parent=15 // pred_fallthru
          _
        // Predicated region
        $region21: #{tpu_custom_call.1} parent=15 // pred_check
          %p176 = pneg %p76
        $region22: #{tpu_custom_call.1} parent=15 // pred_check_branch
          %178 = sbr.rel (%p176) target = $region24
        $region23: #{tpu_custom_call.1} parent=15 // pred_region
          %s179 = sand.u32 %s18, 1
          %s180 = scalar_lea.sflag [#allocation7], %s179
          %s181 = sand.u32 %s66, 1
          %s182 = smul.addr %s181, 256
          %s183 = scalar_lea.vmem [#allocation6], %s182
          %185 = vsyncadd %s180, 0
          %s186 = smul.addr %s26, 64
          %s187 = smul.addr %s186, 4
          %s188 = scalar_lea.hbm %s1, %s187
          %s189 = sshll.u32 %s188, 4
          %s190 = int_to_ptr.hbm [resolvable:$true] %s189
          %s191 = sshll.u32 %s183, 4
          %s192 = int_to_ptr.vmem [resolvable:$true] %s191
          %197 = dma.hbm_to_vmem [thread:$0]  %s190, 4096, %s192, %s180, 128, 128, 8
        $region24: #{tpu_custom_call.1} parent=15 // pred_fallthru
          _
        // Predicated region
        $region25: #{tpu_custom_call.1} parent=15 // pred_check
          %p198 = pneg %p102
        $region26: #{tpu_custom_call.1} parent=15 // pred_check_branch
          %200 = sbr.rel (%p198) target = $region28
        $region27: #{tpu_custom_call.1} parent=15 // pred_region
          %s201 = sand.u32 %s18, 1
          %s202 = scalar_lea.sflag [#allocation7], %s201
          %s203 = sand.u32 %s92, 1
          %s204 = smul.addr %s203, 2
          %s205 = scalar_lea.vmem [#allocation8], %s204
          %207 = vsyncadd %s202, 0
          %s208 = smul.addr %s26, 2
          %s209 = scalar_lea.hbm %s2, %s208
          %s211 = sshll.u32 %s209, 4
          %s212 = int_to_ptr.hbm [resolvable:$true] %s211
          %s213 = sshll.u32 %s205, 4
          %s214 = int_to_ptr.vmem [resolvable:$true] %s213
          %216 = dma.hbm_to_vmem [thread:$0]  %s212, 32, %s214, %s202
        $region28: #{tpu_custom_call.1} parent=15 // pred_fallthru
          _
      $region16: #{tpu_custom_call.1} parent=5 // pred_fallthru
        _
      %p217 = scmp.le.s32.totalorder 1, %s18
      %p218 = scmp.lt.s32.totalorder %s18, 7
      %p219 = pnand %p217, %p218
      %p220 = pneg %p219
      // Predicated region
      $region29: #{tpu_custom_call.1} parent=5 // pred_check
        _
      $region30: #{tpu_custom_call.1} parent=5 // pred_check_branch
        %222 = sbr.rel (%p219) target = $region32
      $region31: #{tpu_custom_call.1} parent=5 // pred_region
        %s223 = ssub.s32 %s18, 1
        %s224 = sand.u32 %s43, 1
        %s225 = scalar_lea.sflag [#allocation4], %s224
        %s226 = sand.u32 %s43, 1
        %s227 = smul.addr %s226, 128
        %s228 = scalar_lea.vmem [#allocation3], %s227
        // Predicated region
        $region33: #{tpu_custom_call.1} parent=31 // pred_check
          %p229 = pneg %p56
        $region34: #{tpu_custom_call.1} parent=31 // pred_check_branch
          %231 = sbr.rel (%p229) target = $region36
        $region35: #{tpu_custom_call.1} parent=31 // pred_region
          %233 = dma.done %s225, 2048
        $region36: #{tpu_custom_call.1} parent=31 // pred_fallthru
          _
        %s234 = sand.u32 %s23, 1
        %s235 = scalar_lea.sflag [#allocation7], %s234
        %s236 = sand.u32 %s69, 1
        %s237 = smul.addr %s236, 256
        %s238 = scalar_lea.vmem [#allocation6], %s237
        // Predicated region
        $region37: #{tpu_custom_call.1} parent=31 // pred_check
          %p239 = pneg %p82
        $region38: #{tpu_custom_call.1} parent=31 // pred_check_branch
          %241 = sbr.rel (%p239) target = $region40
        $region39: #{tpu_custom_call.1} parent=31 // pred_region
          %243 = dma.done %s235, 4096
        $region40: #{tpu_custom_call.1} parent=31 // pred_fallthru
          _
        %s244 = sand.u32 %s23, 1
        %s245 = scalar_lea.sflag [#allocation7], %s244
        %s246 = sand.u32 %s95, 1
        %s247 = smul.addr %s246, 2
        %s248 = scalar_lea.vmem [#allocation8], %s247
        // Predicated region
        $region41: #{tpu_custom_call.1} parent=31 // pred_check
          %p249 = pneg %p108
        $region42: #{tpu_custom_call.1} parent=31 // pred_check_branch
          %251 = sbr.rel (%p249) target = $region44
        $region43: #{tpu_custom_call.1} parent=31 // pred_region
          %253 = dma.done %s245, 32
        $region44: #{tpu_custom_call.1} parent=31 // pred_fallthru
          _
        %s254 = sand.u32 %s43, 1
        %s255 = scalar_lea.sflag [#allocation4], %s254
        %s256 = sand.u32 %s43, 1
        %s257 = smul.addr %s256, 128
        %s258 = scalar_lea.vmem [#allocation3], %s257
        %p259 = pneg %p56
        %p260 = pneg %p53
        %s261 = sand.u32 %s23, 1
        %s262 = scalar_lea.sflag [#allocation7], %s261
        %s263 = sand.u32 %s69, 1
        %s264 = smul.addr %s263, 256
        %s265 = scalar_lea.vmem [#allocation6], %s264
        %p266 = pneg %p82
        %p267 = pneg %p79
        %s268 = sand.u32 %s23, 1
        %s269 = scalar_lea.sflag [#allocation7], %s268
        %s270 = sand.u32 %s95, 1
        %s271 = smul.addr %s270, 2
        %s272 = scalar_lea.vmem [#allocation8], %s271
        %p273 = pneg %p108
        %p274 = pneg %p105
        %p275 = pneg %p134
        %p276 = pneg %p131
        %s277 = sand.u32 %s121, 1
        %s278 = scalar_lea.sflag [#allocation5], %s277
        %s279 = sand.u32 %s121, 1
        %s280 = smul.addr %s279, 256
        %s281 = scalar_lea.vmem [#allocation9], %s280
        %s282 = smul.u32 16, %s27
        %s283 = smul.u32 16, %s27
        %p284 = scmp.lt.s32.totalorder %s28, 0
        %s285 = ssub.s32 0, %s28
        %s286 = scalar_select %p284, %s285, %s28
        %s287 = sand.u32 %s286, 1
        %s288 = ssub.s32 0, %s287
        %s289 = scalar_select %p284, %s288, %s287
        %p290 = scmp.eq.s32.totalorder %s28, 0
        // Predicated region
        $region45: #{tpu_custom_call.1} parent=31 // pred_check
          %p291 = pneg %p290
        $region46: #{tpu_custom_call.1} parent=31 // pred_check_branch
          %293 = sbr.rel (%p291) target = $region48
        $region47: #{tpu_custom_call.1} parent=31 // pred_region
          %v294 = vld [vmem:[%s228] sm:$0xff]
          %v295 = vld [vmem:[%s228 + $0x8] sm:$0xff]
          %v296 = vld [vmem:[%s228 + $0x10] sm:$0xff]
          %v297 = vld [vmem:[%s228 + $0x18] sm:$0xff]
          %v298 = vld [vmem:[%s228 + $0x20] sm:$0xff]
          %v299 = vld [vmem:[%s228 + $0x28] sm:$0xff]
          %v300 = vld [vmem:[%s228 + $0x30] sm:$0xff]
          %v301 = vld [vmem:[%s228 + $0x38] sm:$0xff]
          %v302 = vld [vmem:[%s228 + $0x40] sm:$0xff]
          %v303 = vld [vmem:[%s228 + $0x48] sm:$0xff]
          %v304 = vld [vmem:[%s228 + $0x50] sm:$0xff]
          %v305 = vld [vmem:[%s228 + $0x58] sm:$0xff]
          %v306 = vld [vmem:[%s228 + $0x60] sm:$0xff]
          %v307 = vld [vmem:[%s228 + $0x68] sm:$0xff]
          %v308 = vld [vmem:[%s228 + $0x70] sm:$0xff]
          %v309 = vld [vmem:[%s228 + $0x78] sm:$0xff]
          %310 = vst [vmem:[#allocation2] sm:$0xff] %v294
          %311 = vst [vmem:[#allocation2 + $0x8] sm:$0xff] %v295
          %312 = vst [vmem:[#allocation2 + $0x10] sm:$0xff] %v296
          %313 = vst [vmem:[#allocation2 + $0x18] sm:$0xff] %v297
          %314 = vst [vmem:[#allocation2 + $0x20] sm:$0xff] %v298
          %315 = vst [vmem:[#allocation2 + $0x28] sm:$0xff] %v299
          %316 = vst [vmem:[#allocation2 + $0x30] sm:$0xff] %v300
          %317 = vst [vmem:[#allocation2 + $0x38] sm:$0xff] %v301
          %318 = vst [vmem:[#allocation2 + $0x40] sm:$0xff] %v302
          %319 = vst [vmem:[#allocation2 + $0x48] sm:$0xff] %v303
          %320 = vst [vmem:[#allocation2 + $0x50] sm:$0xff] %v304
          %321 = vst [vmem:[#allocation2 + $0x58] sm:$0xff] %v305
          %322 = vst [vmem:[#allocation2 + $0x60] sm:$0xff] %v306
          %323 = vst [vmem:[#allocation2 + $0x68] sm:$0xff] %v307
          %324 = vst [vmem:[#allocation2 + $0x70] sm:$0xff] %v308
          %325 = vst [vmem:[#allocation2 + $0x78] sm:$0xff] %v309
        $region48: #{tpu_custom_call.1} parent=31 // pred_fallthru
          _
        %s326 = smul.u32 %s289, 32
        %s327 = smul.addr %s326, 4
        %s328 = scalar_lea.vmem [#allocation2], %s327
        %v329 = vld [vmem:[%s328] sm:$0xff]
        %v330 = vld [vmem:[%s328 + $0x8] sm:$0xff]
        %v331 = vld [vmem:[%s328 + $0x10] sm:$0xff]
        %v332 = vld [vmem:[%s328 + $0x18] sm:$0xff]
        %v333 = vld [vmem:[%s328 + $0x20] sm:$0xff]
        %v334 = vld [vmem:[%s328 + $0x28] sm:$0xff]
        %v335 = vld [vmem:[%s328 + $0x30] sm:$0xff]
        %v336 = vld [vmem:[%s328 + $0x38] sm:$0xff]
        %v337 = vld [vmem:[%s328 + $0x40] sm:$0xff]
        %v338 = vld [vmem:[%s328 + $0x48] sm:$0xff]
        %v339 = vld [vmem:[%s328 + $0x50] sm:$0xff]
        %v340 = vld [vmem:[%s328 + $0x58] sm:$0xff]
        %v341 = vld [vmem:[%s328 + $0x60] sm:$0xff]
        %v342 = vld [vmem:[%s328 + $0x68] sm:$0xff]
        %v343 = vld [vmem:[%s328 + $0x70] sm:$0xff]
        %v344 = vld [vmem:[%s328 + $0x78] sm:$0xff]
        %v345 = vld [vmem:[%s238] sm:$0xff]
        %v346 = vld [vmem:[%s238 + $0x8] sm:$0xff]
        %v347 = vld [vmem:[%s238 + $0x10] sm:$0xff]
        %v348 = vld [vmem:[%s238 + $0x18] sm:$0xff]
        %v349 = vld [vmem:[%s238 + $0x20] sm:$0xff]
        %v350 = vld [vmem:[%s238 + $0x28] sm:$0xff]
        %v351 = vld [vmem:[%s238 + $0x30] sm:$0xff]
        %v352 = vld [vmem:[%s238 + $0x38] sm:$0xff]
        %v353 = vld [vmem:[%s238 + $0x40] sm:$0xff]
        %v354 = vld [vmem:[%s238 + $0x48] sm:$0xff]
        %v355 = vld [vmem:[%s238 + $0x50] sm:$0xff]
        %v356 = vld [vmem:[%s238 + $0x58] sm:$0xff]
        %v357 = vld [vmem:[%s238 + $0x60] sm:$0xff]
        %v358 = vld [vmem:[%s238 + $0x68] sm:$0xff]
        %v359 = vld [vmem:[%s238 + $0x70] sm:$0xff]
        %v360 = vld [vmem:[%s238 + $0x78] sm:$0xff]
        %v361 = vld [vmem:[%s238 + $0x80] sm:$0xff]
        %v362 = vld [vmem:[%s238 + $0x88] sm:$0xff]
        %v363 = vld [vmem:[%s238 + $0x90] sm:$0xff]
        %v364 = vld [vmem:[%s238 + $0x98] sm:$0xff]
        %v365 = vld [vmem:[%s238 + $0xa0] sm:$0xff]
        %v366 = vld [vmem:[%s238 + $0xa8] sm:$0xff]
        %v367 = vld [vmem:[%s238 + $0xb0] sm:$0xff]
        %v368 = vld [vmem:[%s238 + $0xb8] sm:$0xff]
        %v369 = vld [vmem:[%s238 + $0xc0] sm:$0xff]
        %v370 = vld [vmem:[%s238 + $0xc8] sm:$0xff]
        %v371 = vld [vmem:[%s238 + $0xd0] sm:$0xff]
        %v372 = vld [vmem:[%s238 + $0xd8] sm:$0xff]
        %v373 = vld [vmem:[%s238 + $0xe0] sm:$0xff]
        %v374 = vld [vmem:[%s238 + $0xe8] sm:$0xff]
        %v375 = vld [vmem:[%s238 + $0xf0] sm:$0xff]
        %v376 = vld [vmem:[%s238 + $0xf8] sm:$0xff]
        %v377 = vld [vmem:[%s248] sm:$0x3]
        %v379 = vperm.slane %v377, 0
        %v380 = vperm.slane %v377, 1
        %v399 = vunpack.c.l.b16 %v329
        %v400 = vunpack.c.h.b16 %v329
        %v401 = vunpack.c.l.b16 %v330
        %v402 = vunpack.c.h.b16 %v330
        %v403 = vunpack.c.l.b16 %v331
        %v404 = vunpack.c.h.b16 %v331
        %v405 = vunpack.c.l.b16 %v332
        %v406 = vunpack.c.h.b16 %v332
        %v407 = vunpack.c.l.b16 %v333
        %v408 = vunpack.c.h.b16 %v333
        %v409 = vunpack.c.l.b16 %v334
        %v410 = vunpack.c.h.b16 %v334
        %v411 = vunpack.c.l.b16 %v335
        %v412 = vunpack.c.h.b16 %v335
        %v413 = vunpack.c.l.b16 %v336
        %v414 = vunpack.c.h.b16 %v336
        %v415 = vunpack.c.l.b16 %v337
        %v416 = vunpack.c.h.b16 %v337
        %v417 = vunpack.c.l.b16 %v338
        %v418 = vunpack.c.h.b16 %v338
        %v419 = vunpack.c.l.b16 %v339
        %v420 = vunpack.c.h.b16 %v339
        %v421 = vunpack.c.l.b16 %v340
        %v422 = vunpack.c.h.b16 %v340
        %v423 = vunpack.c.l.b16 %v341
        %v424 = vunpack.c.h.b16 %v341
        %v425 = vunpack.c.l.b16 %v342
        %v426 = vunpack.c.h.b16 %v342
        %v427 = vunpack.c.l.b16 %v343
        %v428 = vunpack.c.h.b16 %v343
        %v429 = vunpack.c.l.b16 %v344
        %v430 = vunpack.c.h.b16 %v344
        %v431 = vpack.c.b16 %v401, %v399
        %v432 = vpack.c.b16 %v402, %v400
        %v433 = vpack.c.b16 %v405, %v403
        %v434 = vpack.c.b16 %v406, %v404
        %v435 = vpack.c.b16 %v409, %v407
        %v436 = vpack.c.b16 %v410, %v408
        %v437 = vpack.c.b16 %v413, %v411
        %v438 = vpack.c.b16 %v414, %v412
        %v439 = vpack.c.b16 %v417, %v415
        %v440 = vpack.c.b16 %v418, %v416
        %v441 = vpack.c.b16 %v421, %v419
        %v442 = vpack.c.b16 %v422, %v420
        %v443 = vpack.c.b16 %v425, %v423
        %v444 = vpack.c.b16 %v426, %v424
        %v445 = vpack.c.b16 %v429, %v427
        %v446 = vpack.c.b16 %v430, %v428
        %v495 = vunpack.c.l.b16 %v345
        %v496 = vunpack.c.h.b16 %v345
        %v497 = vunpack.c.l.b16 %v346
        %v498 = vunpack.c.h.b16 %v346
        %v499 = vunpack.c.l.b16 %v347
        %v500 = vunpack.c.h.b16 %v347
        %v501 = vunpack.c.l.b16 %v348
        %v502 = vunpack.c.h.b16 %v348
        %v503 = vunpack.c.l.b16 %v349
        %v504 = vunpack.c.h.b16 %v349
        %v505 = vunpack.c.l.b16 %v350
        %v506 = vunpack.c.h.b16 %v350
        %v507 = vunpack.c.l.b16 %v351
        %v508 = vunpack.c.h.b16 %v351
        %v509 = vunpack.c.l.b16 %v352
        %v510 = vunpack.c.h.b16 %v352
        %v511 = vunpack.c.l.b16 %v353
        %v512 = vunpack.c.h.b16 %v353
        %v513 = vunpack.c.l.b16 %v354
        %v514 = vunpack.c.h.b16 %v354
        %v515 = vunpack.c.l.b16 %v355
        %v516 = vunpack.c.h.b16 %v355
        %v517 = vunpack.c.l.b16 %v356
        %v518 = vunpack.c.h.b16 %v356
        %v519 = vunpack.c.l.b16 %v357
        %v520 = vunpack.c.h.b16 %v357
        %v521 = vunpack.c.l.b16 %v358
        %v522 = vunpack.c.h.b16 %v358
        %v523 = vunpack.c.l.b16 %v359
        %v524 = vunpack.c.h.b16 %v359
        %v525 = vunpack.c.l.b16 %v360
        %v526 = vunpack.c.h.b16 %v360
        %v527 = vunpack.c.l.b16 %v361
        %v528 = vunpack.c.h.b16 %v361
        %v529 = vunpack.c.l.b16 %v362
        %v530 = vunpack.c.h.b16 %v362
        %v531 = vunpack.c.l.b16 %v363
        %v532 = vunpack.c.h.b16 %v363
        %v533 = vunpack.c.l.b16 %v364
        %v534 = vunpack.c.h.b16 %v364
        %v535 = vunpack.c.l.b16 %v365
        %v536 = vunpack.c.h.b16 %v365
        %v537 = vunpack.c.l.b16 %v366
        %v538 = vunpack.c.h.b16 %v366
        %v539 = vunpack.c.l.b16 %v367
        %v540 = vunpack.c.h.b16 %v367
        %v541 = vunpack.c.l.b16 %v368
        %v542 = vunpack.c.h.b16 %v368
        %v543 = vunpack.c.l.b16 %v369
        %v544 = vunpack.c.h.b16 %v369
        %v545 = vunpack.c.l.b16 %v370
        %v546 = vunpack.c.h.b16 %v370
        %v547 = vunpack.c.l.b16 %v371
        %v548 = vunpack.c.h.b16 %v371
        %v549 = vunpack.c.l.b16 %v372
        %v550 = vunpack.c.h.b16 %v372
        %v551 = vunpack.c.l.b16 %v373
        %v552 = vunpack.c.h.b16 %v373
        %v553 = vunpack.c.l.b16 %v374
        %v554 = vunpack.c.h.b16 %v374
        %v555 = vunpack.c.l.b16 %v375
        %v556 = vunpack.c.h.b16 %v375
        %v557 = vunpack.c.l.b16 %v376
        %v558 = vunpack.c.h.b16 %v376
        %v559 = vpack.c.b16 %v497, %v495
        %v560 = vpack.c.b16 %v498, %v496
        %v561 = vpack.c.b16 %v501, %v499
        %v562 = vpack.c.b16 %v502, %v500
        %v563 = vpack.c.b16 %v505, %v503
        %v564 = vpack.c.b16 %v506, %v504
        %v565 = vpack.c.b16 %v509, %v507
        %v566 = vpack.c.b16 %v510, %v508
        %v567 = vpack.c.b16 %v513, %v511
        %v568 = vpack.c.b16 %v514, %v512
        %v569 = vpack.c.b16 %v517, %v515
        %v570 = vpack.c.b16 %v518, %v516
        %v571 = vpack.c.b16 %v521, %v519
        %v572 = vpack.c.b16 %v522, %v520
        %v573 = vpack.c.b16 %v525, %v523
        %v574 = vpack.c.b16 %v526, %v524
        %v575 = vpack.c.b16 %v529, %v527
        %v576 = vpack.c.b16 %v530, %v528
        %v577 = vpack.c.b16 %v533, %v531
        %v578 = vpack.c.b16 %v534, %v532
        %v579 = vpack.c.b16 %v537, %v535
        %v580 = vpack.c.b16 %v538, %v536
        %v581 = vpack.c.b16 %v541, %v539
        %v582 = vpack.c.b16 %v542, %v540
        %v583 = vpack.c.b16 %v545, %v543
        %v584 = vpack.c.b16 %v546, %v544
        %v585 = vpack.c.b16 %v549, %v547
        %v586 = vpack.c.b16 %v550, %v548
        %v587 = vpack.c.b16 %v553, %v551
        %v588 = vpack.c.b16 %v554, %v552
        %v589 = vpack.c.b16 %v557, %v555
        %v590 = vpack.c.b16 %v558, %v556
        %623 = vmatpush.bf16.msra.mxu0 %v573
        %624 = vmatpush.bf16.msra.mxu0 %v571
        %625 = vmatpush.bf16.msra.mxu0 %v569
        %626 = vmatpush.bf16.msra.mxu0 %v567
        %627 = vmatpush.bf16.msra.mxu0 %v565
        %628 = vmatpush.bf16.msra.mxu0 %v563
        %629 = vmatpush.bf16.msra.mxu0 %v561
        %630 = vmatpush.bf16.msra.mxu0 %v559
        %631 = vmatmul.bf16.gmra.mxu0 %v431
        %v632 = vpop.f32.mrf.mxu0
        %v633 = vadd.f32 %v379, %v632
        %v634 = vpop.f32.mrf.mxu0
        %v635 = vadd.f32 %v379, %v634
        %636 = vmatmul.bf16.gmra.mxu0 %v433
        %v637 = vpop.f32.mrf.mxu0
        %v638 = vadd.f32 %v379, %v637
        %v639 = vpop.f32.mrf.mxu0
        %v640 = vadd.f32 %v379, %v639
        %641 = vmatmul.bf16.gmra.mxu0 %v435
        %v642 = vpop.f32.mrf.mxu0
        %v643 = vadd.f32 %v379, %v642
        %v644 = vpop.f32.mrf.mxu0
        %v645 = vadd.f32 %v379, %v644
        %646 = vmatmul.bf16.gmra.mxu0 %v437
        %v647 = vpop.f32.mrf.mxu0
        %v648 = vadd.f32 %v379, %v647
        %v649 = vpop.f32.mrf.mxu0
        %v650 = vadd.f32 %v379, %v649
        %651 = vmatmul.bf16.gmra.mxu0 %v439
        %v652 = vpop.f32.mrf.mxu0
        %v653 = vadd.f32 %v379, %v652
        %v654 = vpop.f32.mrf.mxu0
        %v655 = vadd.f32 %v379, %v654
        %656 = vmatmul.bf16.gmra.mxu0 %v441
        %v657 = vpop.f32.mrf.mxu0
        %v658 = vadd.f32 %v379, %v657
        %v659 = vpop.f32.mrf.mxu0
        %v660 = vadd.f32 %v379, %v659
        %661 = vmatmul.bf16.gmra.mxu0 %v443
        %v662 = vpop.f32.mrf.mxu0
        %v663 = vadd.f32 %v379, %v662
        %v664 = vpop.f32.mrf.mxu0
        %v665 = vadd.f32 %v379, %v664
        %666 = vmatmul.bf16.gmra.mxu0 %v445
        %v667 = vpop.f32.mrf.mxu0
        %v668 = vadd.f32 %v379, %v667
        %v669 = vpop.f32.mrf.mxu0
        %v670 = vadd.f32 %v379, %v669
        %671 = vdwg.mxu0
        %672 = vmatpush.bf16.msra.mxu0 %v589
        %673 = vmatpush.bf16.msra.mxu0 %v587
        %674 = vmatpush.bf16.msra.mxu0 %v585
        %675 = vmatpush.bf16.msra.mxu0 %v583
        %676 = vmatpush.bf16.msra.mxu0 %v581
        %677 = vmatpush.bf16.msra.mxu0 %v579
        %678 = vmatpush.bf16.msra.mxu0 %v577
        %679 = vmatpush.bf16.msra.mxu0 %v575
        %680 = vmatmul.bf16.gmra.mxu0 %v432
        %v681 = vpop.f32.mrf.mxu0
        %v682 = vadd.f32 %v633, %v681
        %v683 = vpop.f32.mrf.mxu0
        %v684 = vadd.f32 %v635, %v683
        %685 = vmatmul.bf16.gmra.mxu0 %v434
        %v686 = vpop.f32.mrf.mxu0
        %v687 = vadd.f32 %v638, %v686
        %v688 = vpop.f32.mrf.mxu0
        %v689 = vadd.f32 %v640, %v688
        %690 = vmatmul.bf16.gmra.mxu0 %v436
        %v691 = vpop.f32.mrf.mxu0
        %v692 = vadd.f32 %v643, %v691
        %v693 = vpop.f32.mrf.mxu0
        %v694 = vadd.f32 %v645, %v693
        %695 = vmatmul.bf16.gmra.mxu0 %v438
        %v696 = vpop.f32.mrf.mxu0
        %v697 = vadd.f32 %v648, %v696
        %v698 = vpop.f32.mrf.mxu0
        %v699 = vadd.f32 %v650, %v698
        %700 = vmatmul.bf16.gmra.mxu0 %v440
        %v701 = vpop.f32.mrf.mxu0
        %v702 = vadd.f32 %v653, %v701
        %v703 = vpop.f32.mrf.mxu0
        %v704 = vadd.f32 %v655, %v703
        %705 = vmatmul.bf16.gmra.mxu0 %v442
        %v706 = vpop.f32.mrf.mxu0
        %v707 = vadd.f32 %v658, %v706
        %v708 = vpop.f32.mrf.mxu0
        %v709 = vadd.f32 %v660, %v708
        %710 = vmatmul.bf16.gmra.mxu0 %v444
        %v711 = vpop.f32.mrf.mxu0
        %v712 = vadd.f32 %v663, %v711
        %v713 = vpop.f32.mrf.mxu0
        %v714 = vadd.f32 %v665, %v713
        %715 = vmatmul.bf16.gmra.mxu0 %v446
        %v716 = vpop.f32.mrf.mxu0
        %v717 = vadd.f32 %v668, %v716
        %v718 = vpop.f32.mrf.mxu0
        %v719 = vadd.f32 %v670, %v718
        %720 = vdwg.mxu0
        %721 = vmatpush.bf16.msra.mxu0 %v574
        %722 = vmatpush.bf16.msra.mxu0 %v572
        %723 = vmatpush.bf16.msra.mxu0 %v570
        %724 = vmatpush.bf16.msra.mxu0 %v568
        %725 = vmatpush.bf16.msra.mxu0 %v566
        %726 = vmatpush.bf16.msra.mxu0 %v564
        %727 = vmatpush.bf16.msra.mxu0 %v562
        %728 = vmatpush.bf16.msra.mxu0 %v560
        %729 = vmatmul.bf16.gmra.mxu0 %v431
        %v730 = vpop.f32.mrf.mxu0
        %v731 = vadd.f32 %v380, %v730
        %v732 = vpop.f32.mrf.mxu0
        %v733 = vadd.f32 %v380, %v732
        %734 = vmatmul.bf16.gmra.mxu0 %v433
        %v735 = vpop.f32.mrf.mxu0
        %v736 = vadd.f32 %v380, %v735
        %v737 = vpop.f32.mrf.mxu0
        %v738 = vadd.f32 %v380, %v737
        %739 = vmatmul.bf16.gmra.mxu0 %v435
        %v740 = vpop.f32.mrf.mxu0
        %v741 = vadd.f32 %v380, %v740
        %v742 = vpop.f32.mrf.mxu0
        %v743 = vadd.f32 %v380, %v742
        %744 = vmatmul.bf16.gmra.mxu0 %v437
        %v745 = vpop.f32.mrf.mxu0
        %v746 = vadd.f32 %v380, %v745
        %v747 = vpop.f32.mrf.mxu0
        %v748 = vadd.f32 %v380, %v747
        %749 = vmatmul.bf16.gmra.mxu0 %v439
        %v750 = vpop.f32.mrf.mxu0
        %v751 = vadd.f32 %v380, %v750
        %v752 = vpop.f32.mrf.mxu0
        %v753 = vadd.f32 %v380, %v752
        %754 = vmatmul.bf16.gmra.mxu0 %v441
        %v755 = vpop.f32.mrf.mxu0
        %v756 = vadd.f32 %v380, %v755
        %v757 = vpop.f32.mrf.mxu0
        %v758 = vadd.f32 %v380, %v757
        %759 = vmatmul.bf16.gmra.mxu0 %v443
        %v760 = vpop.f32.mrf.mxu0
        %v761 = vadd.f32 %v380, %v760
        %v762 = vpop.f32.mrf.mxu0
        %v763 = vadd.f32 %v380, %v762
        %764 = vmatmul.bf16.gmra.mxu0 %v445
        %v765 = vpop.f32.mrf.mxu0
        %v766 = vadd.f32 %v380, %v765
        %v767 = vpop.f32.mrf.mxu0
        %v768 = vadd.f32 %v380, %v767
        %769 = vdwg.mxu0
        %770 = vmatpush.bf16.msra.mxu0 %v590
        %771 = vmatpush.bf16.msra.mxu0 %v588
        %772 = vmatpush.bf16.msra.mxu0 %v586
        %773 = vmatpush.bf16.msra.mxu0 %v584
        %774 = vmatpush.bf16.msra.mxu0 %v582
        %775 = vmatpush.bf16.msra.mxu0 %v580
        %776 = vmatpush.bf16.msra.mxu0 %v578
        %777 = vmatpush.bf16.msra.mxu0 %v576
        %778 = vmatmul.bf16.gmra.mxu0 %v432
        %v779 = vpop.f32.mrf.mxu0
        %v780 = vadd.f32 %v731, %v779
        %v781 = vpop.f32.mrf.mxu0
        %v782 = vadd.f32 %v733, %v781
        %783 = vmatmul.bf16.gmra.mxu0 %v434
        %v784 = vpop.f32.mrf.mxu0
        %v785 = vadd.f32 %v736, %v784
        %v786 = vpop.f32.mrf.mxu0
        %v787 = vadd.f32 %v738, %v786
        %788 = vmatmul.bf16.gmra.mxu0 %v436
        %v789 = vpop.f32.mrf.mxu0
        %v790 = vadd.f32 %v741, %v789
        %v791 = vpop.f32.mrf.mxu0
        %v792 = vadd.f32 %v743, %v791
        %793 = vmatmul.bf16.gmra.mxu0 %v438
        %v794 = vpop.f32.mrf.mxu0
        %v795 = vadd.f32 %v746, %v794
        %v796 = vpop.f32.mrf.mxu0
        %v797 = vadd.f32 %v748, %v796
        %798 = vmatmul.bf16.gmra.mxu0 %v440
        %v799 = vpop.f32.mrf.mxu0
        %v800 = vadd.f32 %v751, %v799
        %v801 = vpop.f32.mrf.mxu0
        %v802 = vadd.f32 %v753, %v801
        %803 = vmatmul.bf16.gmra.mxu0 %v442
        %v804 = vpop.f32.mrf.mxu0
        %v805 = vadd.f32 %v756, %v804
        %v806 = vpop.f32.mrf.mxu0
        %v807 = vadd.f32 %v758, %v806
        %808 = vmatmul.bf16.gmra.mxu0 %v444
        %v809 = vpop.f32.mrf.mxu0
        %v810 = vadd.f32 %v761, %v809
        %v811 = vpop.f32.mrf.mxu0
        %v812 = vadd.f32 %v763, %v811
        %813 = vmatmul.bf16.gmra.mxu0 %v446
        %v814 = vpop.f32.mrf.mxu0
        %v815 = vadd.f32 %v766, %v814
        %v816 = vpop.f32.mrf.mxu0
        %v817 = vadd.f32 %v768, %v816
        %818 = vdwg.mxu0
        %v819 = vmax.f32 %v682, 0.0
        %v820 = vmax.f32 %v780, 0.0
        %v821 = vmax.f32 %v684, 0.0
        %v822 = vmax.f32 %v782, 0.0
        %v823 = vmax.f32 %v687, 0.0
        %v824 = vmax.f32 %v785, 0.0
        %v825 = vmax.f32 %v689, 0.0
        %v826 = vmax.f32 %v787, 0.0
        %v827 = vmax.f32 %v692, 0.0
        %v828 = vmax.f32 %v790, 0.0
        %v829 = vmax.f32 %v694, 0.0
        %v830 = vmax.f32 %v792, 0.0
        %v831 = vmax.f32 %v697, 0.0
        %v832 = vmax.f32 %v795, 0.0
        %v833 = vmax.f32 %v699, 0.0
        %v834 = vmax.f32 %v797, 0.0
        %v835 = vmax.f32 %v702, 0.0
        %v836 = vmax.f32 %v800, 0.0
        %v837 = vmax.f32 %v704, 0.0
        %v838 = vmax.f32 %v802, 0.0
        %v839 = vmax.f32 %v707, 0.0
        %v840 = vmax.f32 %v805, 0.0
        %v841 = vmax.f32 %v709, 0.0
        %v842 = vmax.f32 %v807, 0.0
        %v843 = vmax.f32 %v712, 0.0
        %v844 = vmax.f32 %v810, 0.0
        %v845 = vmax.f32 %v714, 0.0
        %v846 = vmax.f32 %v812, 0.0
        %v847 = vmax.f32 %v717, 0.0
        %v848 = vmax.f32 %v815, 0.0
        %v849 = vmax.f32 %v719, 0.0
        %v850 = vmax.f32 %v817, 0.0
        %p851 = scmp.lt.s32.totalorder %s28, 2
        // Predicated region
        $region49: #{tpu_custom_call.1} parent=31 // pred_check
          %p852 = pneg %p851
        $region50: #{tpu_custom_call.1} parent=31 // pred_check_branch
          %854 = sbr.rel (%p852) target = $region52
        $region51: #{tpu_custom_call.1} parent=31 // pred_region
          %v855 = vpack.c.bf16 %v820, %v819
          %v856 = vpack.c.bf16 %v822, %v821
          %v857 = vpack.c.bf16 %v824, %v823
          %v858 = vpack.c.bf16 %v826, %v825
          %v859 = vpack.c.bf16 %v828, %v827
          %v860 = vpack.c.bf16 %v830, %v829
          %v861 = vpack.c.bf16 %v832, %v831
          %v862 = vpack.c.bf16 %v834, %v833
          %v863 = vpack.c.bf16 %v836, %v835
          %v864 = vpack.c.bf16 %v838, %v837
          %v865 = vpack.c.bf16 %v840, %v839
          %v866 = vpack.c.bf16 %v842, %v841
          %v867 = vpack.c.bf16 %v844, %v843
          %v868 = vpack.c.bf16 %v846, %v845
          %v869 = vpack.c.bf16 %v848, %v847
          %v870 = vpack.c.bf16 %v850, %v849
          %s871 = ssub.s32 1, %s289
          %s872 = smul.u32 %s871, 32
          %s873 = smul.addr %s872, 4
          %s874 = scalar_lea.vmem [#allocation2], %s873
          %875 = vst [vmem:[%s874] sm:$0xff] %v855
          %876 = vst [vmem:[%s874 + $0x8] sm:$0xff] %v856
          %877 = vst [vmem:[%s874 + $0x10] sm:$0xff] %v857
          %878 = vst [vmem:[%s874 + $0x18] sm:$0xff] %v858
          %879 = vst [vmem:[%s874 + $0x20] sm:$0xff] %v859
          %880 = vst [vmem:[%s874 + $0x28] sm:$0xff] %v860
          %881 = vst [vmem:[%s874 + $0x30] sm:$0xff] %v861
          %882 = vst [vmem:[%s874 + $0x38] sm:$0xff] %v862
          %883 = vst [vmem:[%s874 + $0x40] sm:$0xff] %v863
          %884 = vst [vmem:[%s874 + $0x48] sm:$0xff] %v864
          %885 = vst [vmem:[%s874 + $0x50] sm:$0xff] %v865
          %886 = vst [vmem:[%s874 + $0x58] sm:$0xff] %v866
          %887 = vst [vmem:[%s874 + $0x60] sm:$0xff] %v867
          %888 = vst [vmem:[%s874 + $0x68] sm:$0xff] %v868
          %889 = vst [vmem:[%s874 + $0x70] sm:$0xff] %v869
          %890 = vst [vmem:[%s874 + $0x78] sm:$0xff] %v870
        $region52: #{tpu_custom_call.1} parent=31 // pred_fallthru
          _
        %p891 = scmp.eq.s32.totalorder %s28, 2
        // Predicated region
        $region53: #{tpu_custom_call.1} parent=31 // pred_check
          %p892 = pneg %p891
        $region54: #{tpu_custom_call.1} parent=31 // pred_check_branch
          %894 = sbr.rel (%p892) target = $region56
        $region55: #{tpu_custom_call.1} parent=31 // pred_region
          %895 = vst [vmem:[%s281] sm:$0xff] %v819
          %896 = vst [vmem:[%s281 + $0x8] sm:$0xff] %v820
          %897 = vst [vmem:[%s281 + $0x10] sm:$0xff] %v821
          %898 = vst [vmem:[%s281 + $0x18] sm:$0xff] %v822
          %899 = vst [vmem:[%s281 + $0x20] sm:$0xff] %v823
          %900 = vst [vmem:[%s281 + $0x28] sm:$0xff] %v824
          %901 = vst [vmem:[%s281 + $0x30] sm:$0xff] %v825
          %902 = vst [vmem:[%s281 + $0x38] sm:$0xff] %v826
          %903 = vst [vmem:[%s281 + $0x40] sm:$0xff] %v827
          %904 = vst [vmem:[%s281 + $0x48] sm:$0xff] %v828
          %905 = vst [vmem:[%s281 + $0x50] sm:$0xff] %v829
          %906 = vst [vmem:[%s281 + $0x58] sm:$0xff] %v830
          %907 = vst [vmem:[%s281 + $0x60] sm:$0xff] %v831
          %908 = vst [vmem:[%s281 + $0x68] sm:$0xff] %v832
          %909 = vst [vmem:[%s281 + $0x70] sm:$0xff] %v833
          %910 = vst [vmem:[%s281 + $0x78] sm:$0xff] %v834
          %911 = vst [vmem:[%s281 + $0x80] sm:$0xff] %v835
          %912 = vst [vmem:[%s281 + $0x88] sm:$0xff] %v836
          %913 = vst [vmem:[%s281 + $0x90] sm:$0xff] %v837
          %914 = vst [vmem:[%s281 + $0x98] sm:$0xff] %v838
          %915 = vst [vmem:[%s281 + $0xa0] sm:$0xff] %v839
          %916 = vst [vmem:[%s281 + $0xa8] sm:$0xff] %v840
          %917 = vst [vmem:[%s281 + $0xb0] sm:$0xff] %v841
          %918 = vst [vmem:[%s281 + $0xb8] sm:$0xff] %v842
          %919 = vst [vmem:[%s281 + $0xc0] sm:$0xff] %v843
          %920 = vst [vmem:[%s281 + $0xc8] sm:$0xff] %v844
          %921 = vst [vmem:[%s281 + $0xd0] sm:$0xff] %v845
          %922 = vst [vmem:[%s281 + $0xd8] sm:$0xff] %v846
          %923 = vst [vmem:[%s281 + $0xe0] sm:$0xff] %v847
          %924 = vst [vmem:[%s281 + $0xe8] sm:$0xff] %v848
          %925 = vst [vmem:[%s281 + $0xf0] sm:$0xff] %v849
          %926 = vst [vmem:[%s281 + $0xf8] sm:$0xff] %v850
        $region56: #{tpu_custom_call.1} parent=31 // pred_fallthru
          _
        %s927 = sand.u32 %s121, 1
        %s928 = scalar_lea.sflag [#allocation5], %s927
        %s929 = sand.u32 %s121, 1
        %s930 = smul.addr %s929, 256
        %s931 = scalar_lea.vmem [#allocation9], %s930
        // Predicated region
        $region57: #{tpu_custom_call.1} parent=31 // pred_check
          %p932 = pneg %p131
        $region58: #{tpu_custom_call.1} parent=31 // pred_check_branch
          %934 = sbr.rel (%p932) target = $region60
        $region59: #{tpu_custom_call.1} parent=31 // pred_region
          %s935 = smul.u32 16, %s27
          %937 = vsyncadd %s928, 0
          %s938 = smul.addr %s935, 2
          %s939 = smul.addr %s938, 8
          %s940 = scalar_lea.hbm %s3, %s939
          %s941 = sshll.u32 %s931, 4
          %s942 = int_to_ptr.vmem [resolvable:$true] %s941
          %s943 = sshll.u32 %s940, 4
          %s944 = int_to_ptr.hbm [resolvable:$true] %s943
          %949 = dma.vmem_to_hbm [thread:$0]  %s942, 4096, %s944, %s928, 256, 256, 16
        $region60: #{tpu_custom_call.1} parent=31 // pred_fallthru
          _
      $region32: #{tpu_custom_call.1} parent=5 // pred_fallthru
        _
      %p950 = scmp.le.s32.totalorder 2, %s18
      // Predicated region
      $region61: #{tpu_custom_call.1} parent=5 // pred_check
        %p951 = pneg %p950
      $region62: #{tpu_custom_call.1} parent=5 // pred_check_branch
        %953 = sbr.rel (%p951) target = $region64
      $region63: #{tpu_custom_call.1} parent=5 // pred_region
        %s954 = ssub.s32 %s18, 2
        // Predicated region
        $region65: #{tpu_custom_call.1} parent=63 // pred_check
          %p955 = pneg %p137
        $region66: #{tpu_custom_call.1} parent=63 // pred_check_branch
          %957 = sbr.rel (%p955) target = $region68
        $region67: #{tpu_custom_call.1} parent=63 // pred_region
          %s958 = sand.u32 %s122, 1
          %s959 = scalar_lea.sflag [#allocation5], %s958
          %s960 = sand.u32 %s122, 1
          %s961 = smul.addr %s960, 256
          %s962 = scalar_lea.vmem [#allocation9], %s961
          %964 = dma.done %s959, 4096
        $region68: #{tpu_custom_call.1} parent=63 // pred_fallthru
          _
      $region64: #{tpu_custom_call.1} parent=5 // pred_fallthru
        _
    $region6: #{tpu_custom_call.1} parent=1 // loop_footer
      %s22 = sadd.s32 1, %s18
    $region7: #{tpu_custom_call.1} parent=1 // loop_footer_branch
      %17 = sbr.rel target = $region3
    $region8: #{tpu_custom_call.1} parent=1 // loop_exit
      _
    %965 = vsyncpa [#allocation4], 1
    %s966 = scalar_lea.sflag [#allocation4], 1
    %967 = vsyncpa %s966, 1
    %968 = vsyncpa [#allocation7], 1
    %s969 = scalar_lea.sflag [#allocation7], 1
    %970 = vsyncpa %s969, 1
    %971 = vsyncpa [#allocation5], 1
    %s972 = scalar_lea.sflag [#allocation5], 1
    %973 = vsyncpa %s972, 1

</llo_original>
